<compile_context>
chip_gen: v7x
topology: tpu7x:2x2x1
jax: 0.10.0
libtpu: 0.0.40
codegen_flags: <defaults>
</compile_context>

<pallas_src>
import jax
import jax.numpy as jnp
from jax.experimental import pallas as pl
from jax.experimental.pallas import tpu as pltpu


# ---------------------------------------------------------------------------
# Kernels
# ---------------------------------------------------------------------------
def _embed_kernel_node(x_ref, sel1_ref, sel2_ref, n1_ref, n2_ref, x1_ref, x2_ref):
    # x_ref:    (R, L)  R = TB*N rows of the current batch fold
    # sel1/2:   (L, W)  one-hot placement matrices (resident across the grid)
    # n1/n2:    (R, W)  batch-invariant node halves, zeros in the x columns (resident)
    # x1/x2:    (R, W)  lane-dense output slabs, W = num_samp * C
    x = x_ref[...]
    x1_ref[...] = jnp.dot(x, sel1_ref[...], preferred_element_type=jnp.float32) + n1_ref[...]
    x2_ref[...] = jnp.dot(x, sel2_ref[...], preferred_element_type=jnp.float32) + n2_ref[...]


def _embed_kernel_nonode(x_ref, sel1_ref, sel2_ref, x1_ref, x2_ref):
    # IF_node=False variant: no node slabs, no adds.
    x = x_ref[...]
    x1_ref[...] = jnp.dot(x, sel1_ref[...], preferred_element_type=jnp.float32)
    x2_ref[...] = jnp.dot(x, sel2_ref[...], preferred_element_type=jnp.float32)


# ---------------------------------------------------------------------------
# Tiling helpers
# ---------------------------------------------------------------------------
def _vmem_footprint(tb, N, L, W, if_node):
    """Pipelined VMEM bytes for one grid step (all buffers double-buffered)."""
    bpe = 4  # float32
    R = tb * N
    x_buf = 2 * R * L * bpe                      # input rows (double-buffered)
    sel_buf = 2 * 2 * L * W * bpe                # two resident selection matrices
    node_buf = (2 * 2 * R * W * bpe) if if_node else 0  # two resident node slabs
    out_buf = 2 * 2 * R * W * bpe                # two outputs (double-buffered)
    return x_buf + sel_buf + node_buf + out_buf


def _pick_tb(B, N, L, W, if_node, budget_bytes=12 * 1024 * 1024):
    """Largest batch fold TB (divisor of B) whose pipelined VMEM footprint fits the
    budget and keeps the block's second-minor dim 8-aligned; prefer >=2 grid steps
    so v7x's two TensorCores can split the batch axis."""
    divisors = [d for d in range(1, B + 1) if B % d == 0]
    aligned = [d for d in divisors if (d * N) % 8 == 0 or d == B]
    feasible = [d for d in aligned if _vmem_footprint(d, N, L, W, if_node) <= budget_bytes]
    multi = [d for d in feasible if B // d >= 2]
    if multi:
        return max(multi)
    if feasible:
        return max(feasible)
    return min(aligned)  # smallest-footprint legal fallback (handled via vmem_limit)


# ---------------------------------------------------------------------------
# Forward wrapper
# ---------------------------------------------------------------------------
def embed_forward(x, node_emb, *, num_samp, if_node):
    """Pallas equivalent of embed.forward (x_mark is unused by the PyTorch forward)."""
    B, N, L = x.shape
    assert L % num_samp == 0, "Input_len must be divisible by num_samp"
    seg = L // num_samp
    C = 2 * seg if if_node else seg
    W = num_samp * C

    TB = _pick_tb(B, N, L, W, if_node)
    grid = (B // TB,)
    R = TB * N  # rows per grid step

    # ---- wrapper-side layout plumbing (tiny, batch-invariant, computed once) ----
    k = jnp.arange(W)
    i = k // C            # sample index
    j = k % C             # position within sample
    is_x = j < seg        # x-half vs node-half of each sample
    l = jnp.arange(L)

    # One-hot placement matrices (exact in f32): column k of the slab pulls
    #   x[:, j*num_samp + i]  (down_sampling)     for sel1,
    #   x[:, i*seg + j]       (Interval_sample)   for sel2,
    # and is all-zero for the node columns.
    src1 = jnp.where(is_x, j * num_samp + i, -1)
    src2 = jnp.where(is_x, i * seg + j, -1)
    sel1 = (l[:, None] == src1[None, :]).astype(jnp.float32)   # (L, W)
    sel2 = (l[:, None] == src2[None, :]).astype(jnp.float32)   # (L, W)

    x2d = x.astype(jnp.float32).reshape(B * N, L)   # free metadata reshape

    row_spec = pl.BlockSpec((R, L), lambda b: (b, 0))
    out_spec = pl.BlockSpec((R, W), lambda b: (b, 0))

    def res_spec(shape):                             # resident across the grid
        return pl.BlockSpec(shape, lambda b: (0, 0))

    in_specs = [row_spec, res_spec((L, W)), res_spec((L, W))]
    operands = [x2d, sel1, sel2]

    if if_node:
        # Batch-invariant node halves, hoisted out of the grid loop (zeros in x cols).
        idx1 = jnp.where(is_x, 0, (j - seg) * num_samp + i)    # down_sampling of node
        idx2 = jnp.where(is_x, 0, i * seg + (j - seg))         # Interval_sample of node
        n1_row = jnp.where(is_x[None, :], 0.0, jnp.take(node_emb.astype(jnp.float32),
                                                        idx1, axis=1))  # (N, W)
        n2_row = jnp.where(is_x[None, :], 0.0, jnp.take(node_emb.astype(jnp.float32),
                                                        idx2, axis=1))
        n1 = jnp.tile(n1_row, (TB, 1))   # (R, W), resident across the grid
        n2 = jnp.tile(n2_row, (TB, 1))
        in_specs += [res_spec((R, W)), res_spec((R, W))]
        operands += [n1, n2]
        kernel = _embed_kernel_node
    else:
        kernel = _embed_kernel_nonode

    footprint = _vmem_footprint(TB, N, L, W, if_node)
    cp_kwargs = dict(dimension_semantics=("parallel",))
    if footprint > 14 * 1024 * 1024:
        # Fallback for shapes where even a single batch fold overflows the default
        # scoped-VMEM limit; cap below v7x's 64 MiB physical VMEM per TensorCore.
        cp_kwargs["vmem_limit_bytes"] = int(min(footprint + (2 << 20), 56 * 1024 * 1024))

    x1_flat, x2_flat = pl.pallas_call(
        kernel,
        out_shape=[jax.ShapeDtypeStruct((B * N, W), jnp.float32)] * 2,
        grid_spec=pltpu.PrefetchScalarGridSpec(
            num_scalar_prefetch=0,
            grid=grid,
            in_specs=in_specs,
            out_specs=[out_spec, out_spec],
        ),
        compiler_params=pltpu.CompilerParams(**cp_kwargs),
    )(*operands)

    x1 = x1_flat.reshape(B, N, num_samp, C)
    x2 = x2_flat.reshape(B, N, num_samp, C)
    return x1, x2


# ---------------------------------------------------------------------------
# Pure-JAX reference (direct transcription of the PyTorch forward)
# ---------------------------------------------------------------------------
def _reference_embed(x, node_emb, num_samp, if_node):
    B, N, L = x.shape
    xe = x[..., None]                                                   # (B,N,L,1)
    node1 = jnp.broadcast_to(node_emb[None], (B, N, L))[..., None]      # (B,N,L,1)

    def down(d):
        parts = [d[:, :, i::num_samp, :] for i in range(num_samp)]
        return jnp.swapaxes(jnp.concatenate(parts, axis=3), 2, 3)

    def interval(d):
        seg = d.shape[2] // num_samp
        parts = [d[:, :, seg * i:seg * (i + 1), :] for i in range(num_samp)]
        return jnp.swapaxes(jnp.concatenate(parts, axis=3), 2, 3)

    x1, x2 = down(xe), interval(xe)
    if if_node:
        x1 = jnp.concatenate([x1, down(node1)], axis=-1)
        x2 = jnp.concatenate([x2, interval(node1)], axis=-1)
    return x1, x2


if __name__ == "__main__":
    key = jax.random.PRNGKey(0)
    B, N, L = 4, 8, 16          # batch, num_id, Input_len
    num_samp = 4

    k1, k2, k3 = jax.random.split(key, 3)
    x = jax.random.normal(k1, (B, N, L), dtype=jnp.float32)
    x_mark = jax.random.normal(k2, (B, L, 2), dtype=jnp.float32)  # unused by forward

    # node_emb ~ xavier_uniform_ on shape (num_id, Input_len)
    bound = (6.0 / (N + L)) ** 0.5
    node_emb = jax.random.uniform(
        k3, (N, L), minval=-bound, maxval=bound, dtype=jnp.float32)

    for if_node in (True, False):
        x1, x2 = embed_forward(x, node_emb, num_samp=num_samp, if_node=if_node)
        jax.block_until_ready((x1, x2))
        r1, r2 = _reference_embed(x, node_emb, num_samp, if_node)
        assert x1.shape == r1.shape and x2.shape == r2.shape
        assert jnp.array_equal(x1, r1), f"x_1 mismatch (IF_node={if_node})"
        assert jnp.array_equal(x2, r2), f"x_2 mismatch (IF_node={if_node})"

    print("KERNEL_OK")
</pallas_src>

<mosaic_0001>
module attributes {stable_mosaic.version = 11 : i64} {
  func.func @_embed_kernel_node(%arg0: i32, %arg1: memref<16x16xf32, #tpu.memory_space<vmem>>, %arg2: memref<16x32xf32, #tpu.memory_space<vmem>>, %arg3: memref<16x32xf32, #tpu.memory_space<vmem>>, %arg4: memref<16x32xf32, #tpu.memory_space<vmem>>, %arg5: memref<16x32xf32, #tpu.memory_space<vmem>>, %arg6: memref<16x32xf32, #tpu.memory_space<vmem>>, %arg7: memref<16x32xf32, #tpu.memory_space<vmem>>) attributes {dimension_semantics = [#tpu.dimension_semantics<parallel>], iteration_bounds = array<i64: 2>, scalar_prefetch = 0 : i64, scratch_operands = 0 : i64, tpu.core_type = #tpu.core_type<tc>, window_params = [{transform_indices = @transform_0, window_bounds = array<i64: 16, 16>}, {pipeline_mode = #tpu.pipeline_mode<synchronous>, transform_indices = @transform_1, window_bounds = array<i64: 16, 32>}, {pipeline_mode = #tpu.pipeline_mode<synchronous>, transform_indices = @transform_2, window_bounds = array<i64: 16, 32>}, {pipeline_mode = #tpu.pipeline_mode<synchronous>, transform_indices = @transform_3, window_bounds = array<i64: 16, 32>}, {pipeline_mode = #tpu.pipeline_mode<synchronous>, transform_indices = @transform_4, window_bounds = array<i64: 16, 32>}, {transform_indices = @transform_5, window_bounds = array<i64: 16, 32>}, {transform_indices = @transform_6, window_bounds = array<i64: 16, 32>}]} {
    %c0 = arith.constant 0 : index
    %c0_0 = arith.constant 0 : index
    %0 = vector.load %arg1[%c0, %c0_0] : memref<16x16xf32, #tpu.memory_space<vmem>>, vector<16x16xf32>
    %c0_1 = arith.constant 0 : index
    %c0_2 = arith.constant 0 : index
    %1 = vector.load %arg2[%c0_1, %c0_2] : memref<16x32xf32, #tpu.memory_space<vmem>>, vector<16x32xf32>
    %cst = arith.constant dense<0.000000e+00> : vector<16x32xf32>
    %2 = tpu.matmul %0, %1, %cst {dimension_numbers = #tpu.dot_dimension_numbers<[1], [0], [0], [1], [0, 0, 1, 1], [], []>} : vector<16x16xf32>, vector<16x32xf32>, vector<16x32xf32> -> vector<16x32xf32>
    %c0_3 = arith.constant 0 : index
    %c0_4 = arith.constant 0 : index
    %3 = vector.load %arg4[%c0_3, %c0_4] : memref<16x32xf32, #tpu.memory_space<vmem>>, vector<16x32xf32>
    %4 = arith.addf %2, %3 : vector<16x32xf32>
    %c0_5 = arith.constant 0 : index
    %c0_6 = arith.constant 0 : index
    %5 = vector.load %arg6[%c0_5, %c0_6] : memref<16x32xf32, #tpu.memory_space<vmem>>, vector<16x32xf32>
    tpu.vector_store %arg6[%c0_5, %c0_6], %4 {strides = array<i32>} : memref<16x32xf32, #tpu.memory_space<vmem>>, vector<16x32xf32>,
    %c0_7 = arith.constant 0 : index
    %c0_8 = arith.constant 0 : index
    %6 = vector.load %arg3[%c0_7, %c0_8] : memref<16x32xf32, #tpu.memory_space<vmem>>, vector<16x32xf32>
    %cst_9 = arith.constant dense<0.000000e+00> : vector<16x32xf32>
    %7 = tpu.matmul %0, %6, %cst_9 {dimension_numbers = #tpu.dot_dimension_numbers<[1], [0], [0], [1], [0, 0, 1, 1], [], []>} : vector<16x16xf32>, vector<16x32xf32>, vector<16x32xf32> -> vector<16x32xf32>
    %c0_10 = arith.constant 0 : index
    %c0_11 = arith.constant 0 : index
    %8 = vector.load %arg5[%c0_10, %c0_11] : memref<16x32xf32, #tpu.memory_space<vmem>>, vector<16x32xf32>
    %9 = arith.addf %7, %8 : vector<16x32xf32>
    %c0_12 = arith.constant 0 : index
    %c0_13 = arith.constant 0 : index
    %10 = vector.load %arg7[%c0_12, %c0_13] : memref<16x32xf32, #tpu.memory_space<vmem>>, vector<16x32xf32>
    tpu.vector_store %arg7[%c0_12, %c0_13], %9 {strides = array<i32>} : memref<16x32xf32, #tpu.memory_space<vmem>>, vector<16x32xf32>,
    return
  }
  func.func @transform_0(%arg0: i32) -> (i32, i32) {
    %c0_i32 = arith.constant 0 : i32
    %c0_i32_0 = arith.constant 0 : i32
    return %arg0, %c0_i32 : i32, i32
  }
  func.func @transform_1(%arg0: i32) -> (i32, i32) {
    %c0_i32 = arith.constant 0 : i32
    %c0_i32_0 = arith.constant 0 : i32
    %c0_i32_1 = arith.constant 0 : i32
    return %c0_i32, %c0_i32_0 : i32, i32
  }
  func.func @transform_2(%arg0: i32) -> (i32, i32) {
    %c0_i32 = arith.constant 0 : i32
    %c0_i32_0 = arith.constant 0 : i32
    %c0_i32_1 = arith.constant 0 : i32
    return %c0_i32, %c0_i32_0 : i32, i32
  }
  func.func @transform_3(%arg0: i32) -> (i32, i32) {
    %c0_i32 = arith.constant 0 : i32
    %c0_i32_0 = arith.constant 0 : i32
    %c0_i32_1 = arith.constant 0 : i32
    return %c0_i32, %c0_i32_0 : i32, i32
  }
  func.func @transform_4(%arg0: i32) -> (i32, i32) {
    %c0_i32 = arith.constant 0 : i32
    %c0_i32_0 = arith.constant 0 : i32
    %c0_i32_1 = arith.constant 0 : i32
    return %c0_i32, %c0_i32_0 : i32, i32
  }
  func.func @transform_5(%arg0: i32) -> (i32, i32) {
    %c0_i32 = arith.constant 0 : i32
    %c0_i32_0 = arith.constant 0 : i32
    return %arg0, %c0_i32 : i32, i32
  }
  func.func @transform_6(%arg0: i32) -> (i32, i32) {
    %c0_i32 = arith.constant 0 : i32
    %c0_i32_0 = arith.constant 0 : i32
    return %arg0, %c0_i32 : i32, i32
  }
}

</mosaic_0001>

<llo_original>
// kernel: tpu_custom_call.1
$region0: #{tpu_custom_call.1}
  #allocation0 [shape = 'u32[]', space=smem, size = 0x4, offset = 0x4, fixed_abs, tag = 'smem constant byte address 0x4 - core index']
  #allocation1 [shape = 'u32[144,128]{1,0:T(1,128)}', space=vmem, size = 0x12000, scoped, tag = 'internal scratch']
  %s0 = inlined_call_operand.vmem [shape: f32[32,16], index: 0, kind: input, shape index: {}]
  %s1 = inlined_call_operand.vmem [shape: f32[16,32], index: 1, kind: input, shape index: {}]
  %s2 = inlined_call_operand.vmem [shape: f32[16,32], index: 2, kind: input, shape index: {}]
  %s3 = inlined_call_operand.vmem [shape: f32[16,32], index: 3, kind: input, shape index: {}]
  %s4 = inlined_call_operand.hbm [shape: f32[16,32], index: 4, kind: input, shape index: {}]
  %s5 = inlined_call_operand.hbm [shape: f32[32,32], index: 5, kind: output, shape index: {0}]
  %s6 = inlined_call_operand.hbm [shape: f32[32,32], index: 6, kind: output, shape index: {1}]
  %7 = xla_tuple %s5, %s6
  %s8 = sld [smem:[#allocation0]]
  $region65: #{tpu_custom_call.1} parent=0
    _
  %s10 = ssub.s32 1, %s8
  %s11 = scalar_select 0, %s10, %s8
  $region1: #{tpu_custom_call.1} parent=0
    #allocation2 [shape = 'u8[8192]{0}', space=vmem, size = 0x2000, scoped, tag = 'input window, operand 4, single buffered']
    #allocation3 [shape = 's32[2]{0}', space=sflag, size = 0x8, scoped, tag = 'scoped memory for tpu_custom_call.1']
    #allocation4 [shape = 's32[2]{0}', space=sflag, size = 0x8, scoped, tag = 'scoped memory for tpu_custom_call.1']
    #allocation5 [shape = 'u8[16384]{0}', space=vmem, size = 0x4000, scoped, tag = 'output window, operand 0']
    #allocation6 [shape = 'u8[16384]{0}', space=vmem, size = 0x4000, scoped, tag = 'output window, operand 1']
    #allocation7 [shape = 's32[2]{0}', space=sflag, size = 0x8, scoped, tag = 'scoped memory for tpu_custom_call.1']
    %12 = vsyncpa [#allocation3], 0
    %13 = vsyncpa [#allocation4], 0
    %s14 = scalar_lea.sflag [#allocation4], 1
    %15 = vsyncpa %s14, 0
    %16 = vsyncpa [#allocation7], 0
    %s17 = scalar_lea.sflag [#allocation7], 1
    %18 = vsyncpa %s17, 0
    loop: start=0, step=1, limit=4
    $region2: #{tpu_custom_call.1} parent=1 // loop_pre_header
      _
    $region3: #{tpu_custom_call.1} parent=1 // loop_header
      %s20 = sphi 0, %s24
      %p21 = scmp.ge.s32.totalorder %s20, 4
      %s30 = sphi 0, %s32
      %s33 = sphi 0, %s30
      %s34 = sphi 0, %s33
      %s50 = sphi 0, %s34
      %s54 = sphi 0, %s54
      %s56 = sphi 0, %s54
      %s57 = sphi 0, %s56
      %s71 = sphi 0, %s57
      %s75 = sphi 0, %s75
      %s77 = sphi 0, %s75
      %s78 = sphi 0, %s77
      %s92 = sphi 0, %s78
      %s96 = sphi 0, %s96
      %s98 = sphi 0, %s96
      %s99 = sphi 0, %s98
      %s113 = sphi 0, %s99
      %s117 = sphi 0, %s117
      %s119 = sphi 0, %s117
      %s120 = sphi 0, %s119
      %s134 = sphi 0, %s120
      %s140 = sphi 0, %s142
      %s143 = sphi 0, %s140
      %s144 = sphi 0, %s143
      %s160 = sphi 0, %s144
      %s166 = sphi 0, %s168
      %s169 = sphi 0, %s166
      %s170 = sphi 0, %s169
      %s186 = sphi 0, %s170
    $region4: #{tpu_custom_call.1} parent=1 // loop_header_branch
      %23 = sbr.rel (%p21) target = $region8
    $region5: #{tpu_custom_call.1} parent=1 // loop_body
      %s25 = ssub.s32 %s20, 1
      %s26 = ssub.s32 %s20, 2
      %s27 = sadd.s32 %s20, 1
      %s28 = ssub.s32 %s20, %s27
      %p29 = scmp.eq.s32.totalorder %s28, 0
      %s31 = sadd.s32 %s30, 1
      %s32 = scalar_select %p29, %s30, %s31
      %p35 = pneg %p29
      %p36 = scmp.eq.s32.totalorder %s20, 1
      %p37 = por %p35, %p36
      %p38 = scmp.ne.s32.totalorder %s30, %s33
      %p39 = scmp.eq.s32.totalorder %s20, 0
      %p40 = por %p38, %p39
      %p41 = scmp.ne.s32.totalorder %s30, %s33
      %p42 = scmp.eq.s32.totalorder %s25, 1
      %p43 = por %p41, %p42
      %p44 = scmp.ne.s32.totalorder %s33, %s34
      %p45 = scmp.eq.s32.totalorder %s25, 0
      %p46 = por %p44, %p45
      %p47 = scmp.ne.s32.totalorder %s33, %s34
      %p48 = scmp.eq.s32.totalorder %s26, 1
      %p49 = por %p47, %p48
      %p51 = scmp.ne.s32.totalorder %s34, %s50
      %p52 = scmp.eq.s32.totalorder %s26, 0
      %p53 = por %p51, %p52
      %s55 = sadd.s32 %s54, 1
      %p58 = scmp.eq.s32.totalorder %s20, 1
      %p59 = scmp.ne.s32.totalorder %s54, %s56
      %p60 = scmp.eq.s32.totalorder %s20, 0
      %p61 = por %p59, %p60
      %p62 = scmp.ne.s32.totalorder %s54, %s56
      %p63 = scmp.eq.s32.totalorder %s25, 1
      %p64 = por %p62, %p63
      %p65 = scmp.ne.s32.totalorder %s56, %s57
      %p66 = scmp.eq.s32.totalorder %s25, 0
      %p67 = por %p65, %p66
      %p68 = scmp.ne.s32.totalorder %s56, %s57
      %p69 = scmp.eq.s32.totalorder %s26, 1
      %p70 = por %p68, %p69
      %p72 = scmp.ne.s32.totalorder %s57, %s71
      %p73 = scmp.eq.s32.totalorder %s26, 0
      %p74 = por %p72, %p73
      %s76 = sadd.s32 %s75, 1
      %p79 = scmp.eq.s32.totalorder %s20, 1
      %p80 = scmp.ne.s32.totalorder %s75, %s77
      %p81 = scmp.eq.s32.totalorder %s20, 0
      %p82 = por %p80, %p81
      %p83 = scmp.ne.s32.totalorder %s75, %s77
      %p84 = scmp.eq.s32.totalorder %s25, 1
      %p85 = por %p83, %p84
      %p86 = scmp.ne.s32.totalorder %s77, %s78
      %p87 = scmp.eq.s32.totalorder %s25, 0
      %p88 = por %p86, %p87
      %p89 = scmp.ne.s32.totalorder %s77, %s78
      %p90 = scmp.eq.s32.totalorder %s26, 1
      %p91 = por %p89, %p90
      %p93 = scmp.ne.s32.totalorder %s78, %s92
      %p94 = scmp.eq.s32.totalorder %s26, 0
      %p95 = por %p93, %p94
      %s97 = sadd.s32 %s96, 1
      %p100 = scmp.eq.s32.totalorder %s20, 1
      %p101 = scmp.ne.s32.totalorder %s96, %s98
      %p102 = scmp.eq.s32.totalorder %s20, 0
      %p103 = por %p101, %p102
      %p104 = scmp.ne.s32.totalorder %s96, %s98
      %p105 = scmp.eq.s32.totalorder %s25, 1
      %p106 = por %p104, %p105
      %p107 = scmp.ne.s32.totalorder %s98, %s99
      %p108 = scmp.eq.s32.totalorder %s25, 0
      %p109 = por %p107, %p108
      %p110 = scmp.ne.s32.totalorder %s98, %s99
      %p111 = scmp.eq.s32.totalorder %s26, 1
      %p112 = por %p110, %p111
      %p114 = scmp.ne.s32.totalorder %s99, %s113
      %p115 = scmp.eq.s32.totalorder %s26, 0
      %p116 = por %p114, %p115
      %s118 = sadd.s32 %s117, 1
      %p121 = scmp.eq.s32.totalorder %s20, 1
      %p122 = scmp.ne.s32.totalorder %s117, %s119
      %p123 = scmp.eq.s32.totalorder %s20, 0
      %p124 = por %p122, %p123
      %p125 = scmp.ne.s32.totalorder %s117, %s119
      %p126 = scmp.eq.s32.totalorder %s25, 1
      %p127 = por %p125, %p126
      %p128 = scmp.ne.s32.totalorder %s119, %s120
      %p129 = scmp.eq.s32.totalorder %s25, 0
      %p130 = por %p128, %p129
      %p131 = scmp.ne.s32.totalorder %s119, %s120
      %p132 = scmp.eq.s32.totalorder %s26, 1
      %p133 = por %p131, %p132
      %p135 = scmp.ne.s32.totalorder %s120, %s134
      %p136 = scmp.eq.s32.totalorder %s26, 0
      %p137 = por %p135, %p136
      %s138 = ssub.s32 %s20, %s27
      %p139 = scmp.eq.s32.totalorder %s138, 0
      %s141 = sadd.s32 %s140, 1
      %s142 = scalar_select %p139, %s140, %s141
      %p145 = pneg %p139
      %p146 = scmp.eq.s32.totalorder %s20, 1
      %p147 = por %p145, %p146
      %p148 = scmp.ne.s32.totalorder %s140, %s143
      %p149 = scmp.eq.s32.totalorder %s20, 0
      %p150 = por %p148, %p149
      %p151 = scmp.ne.s32.totalorder %s140, %s143
      %p152 = scmp.eq.s32.totalorder %s25, 1
      %p153 = por %p151, %p152
      %p154 = scmp.ne.s32.totalorder %s143, %s144
      %p155 = scmp.eq.s32.totalorder %s25, 0
      %p156 = por %p154, %p155
      %p157 = scmp.ne.s32.totalorder %s143, %s144
      %p158 = scmp.eq.s32.totalorder %s26, 1
      %p159 = por %p157, %p158
      %p161 = scmp.ne.s32.totalorder %s144, %s160
      %p162 = scmp.eq.s32.totalorder %s26, 0
      %p163 = por %p161, %p162
      %s164 = ssub.s32 %s20, %s27
      %p165 = scmp.eq.s32.totalorder %s164, 0
      %s167 = sadd.s32 %s166, 1
      %s168 = scalar_select %p165, %s166, %s167
      %p171 = pneg %p165
      %p172 = scmp.eq.s32.totalorder %s20, 1
      %p173 = por %p171, %p172
      %p174 = scmp.ne.s32.totalorder %s166, %s169
      %p175 = scmp.eq.s32.totalorder %s20, 0
      %p176 = por %p174, %p175
      %p177 = scmp.ne.s32.totalorder %s166, %s169
      %p178 = scmp.eq.s32.totalorder %s25, 1
      %p179 = por %p177, %p178
      %p180 = scmp.ne.s32.totalorder %s169, %s170
      %p181 = scmp.eq.s32.totalorder %s25, 0
      %p182 = por %p180, %p181
      %p183 = scmp.ne.s32.totalorder %s169, %s170
      %p184 = scmp.eq.s32.totalorder %s26, 1
      %p185 = por %p183, %p184
      %p187 = scmp.ne.s32.totalorder %s170, %s186
      %p188 = scmp.eq.s32.totalorder %s26, 0
      %p189 = por %p187, %p188
      %p190 = scmp.le.s32.totalorder 1, %s20
      %p191 = scmp.lt.s32.totalorder %s20, 3
      %p192 = pnand %p190, %p191
      %p193 = pneg %p192
      // Predicated region
      $region9: #{tpu_custom_call.1} parent=5 // pred_check
        _
      $region10: #{tpu_custom_call.1} parent=5 // pred_check_branch
        %195 = sbr.rel (%p192) target = $region12
      $region11: #{tpu_custom_call.1} parent=5 // pred_region
        %s196 = ssub.s32 %s20, 1
        // Predicated region
        $region13: #{tpu_custom_call.1} parent=11 // pred_check
          %p197 = pneg %p67
        $region14: #{tpu_custom_call.1} parent=11 // pred_check_branch
          %199 = sbr.rel (%p197) target = $region16
        $region15: #{tpu_custom_call.1} parent=11 // pred_region
          _
        $region16: #{tpu_custom_call.1} parent=11 // pred_fallthru
          _
        // Predicated region
        $region17: #{tpu_custom_call.1} parent=11 // pred_check
          %p200 = pneg %p88
        $region18: #{tpu_custom_call.1} parent=11 // pred_check_branch
          %202 = sbr.rel (%p200) target = $region20
        $region19: #{tpu_custom_call.1} parent=11 // pred_region
          _
        $region20: #{tpu_custom_call.1} parent=11 // pred_fallthru
          _
        // Predicated region
        $region21: #{tpu_custom_call.1} parent=11 // pred_check
          %p203 = pneg %p109
        $region22: #{tpu_custom_call.1} parent=11 // pred_check_branch
          %205 = sbr.rel (%p203) target = $region24
        $region23: #{tpu_custom_call.1} parent=11 // pred_region
          _
        $region24: #{tpu_custom_call.1} parent=11 // pred_fallthru
          _
        // Predicated region
        $region25: #{tpu_custom_call.1} parent=11 // pred_check
          %p206 = pneg %p130
        $region26: #{tpu_custom_call.1} parent=11 // pred_check_branch
          %208 = sbr.rel (%p206) target = $region28
        $region27: #{tpu_custom_call.1} parent=11 // pred_region
          %s210 = ssub.s32 256, 256
          %211 = vsyncadd [#allocation3], %s210
          %s212 = sshll.u32 [#allocation2], 4
          %s213 = int_to_ptr.vmem [resolvable:$true] %s212
          %218 = dma.hbm_to_vmem [thread:$0]  %s4, 256, %s213, [#allocation3], 128, 128, 8
        $region28: #{tpu_custom_call.1} parent=11 // pred_fallthru
          _
      $region12: #{tpu_custom_call.1} parent=5 // pred_fallthru
        _
      %p219 = scmp.lt.s32.totalorder %s20, 2
      // Predicated region
      $region29: #{tpu_custom_call.1} parent=5 // pred_check
        %p220 = pneg %p219
      $region30: #{tpu_custom_call.1} parent=5 // pred_check_branch
        %222 = sbr.rel (%p220) target = $region32
      $region31: #{tpu_custom_call.1} parent=5 // pred_region
        // Predicated region
        $region33: #{tpu_custom_call.1} parent=31 // pred_check
          %p223 = pneg %p40
        $region34: #{tpu_custom_call.1} parent=31 // pred_check_branch
          %225 = sbr.rel (%p223) target = $region36
        $region35: #{tpu_custom_call.1} parent=31 // pred_region
          %s226 = smul.u32 2, %s20
          %p227 = scmp.lt.s32.totalorder %s226, 3
          %s228 = scalar_select %p227, %s226, 3
          %s229 = smul.addr %s228, 8
          %s230 = scalar_lea.vmem %s0, %s229
          %s231 = smul.u32 2, %s20
        $region36: #{tpu_custom_call.1} parent=31 // pred_fallthru
          _
      $region32: #{tpu_custom_call.1} parent=5 // pred_fallthru
        _
      %p232 = scmp.le.s32.totalorder 1, %s20
      %p233 = scmp.lt.s32.totalorder %s20, 3
      %p234 = pnand %p232, %p233
      %p235 = pneg %p234
      // Predicated region
      $region37: #{tpu_custom_call.1} parent=5 // pred_check
        _
      $region38: #{tpu_custom_call.1} parent=5 // pred_check_branch
        %237 = sbr.rel (%p234) target = $region40
      $region39: #{tpu_custom_call.1} parent=5 // pred_region
        %s238 = ssub.s32 %s20, 1
        // Predicated region
        $region41: #{tpu_custom_call.1} parent=39 // pred_check
          %p239 = pneg %p130
        $region42: #{tpu_custom_call.1} parent=39 // pred_check_branch
          %241 = sbr.rel (%p239) target = $region44
        $region43: #{tpu_custom_call.1} parent=39 // pred_region
          %242 = dma.done [#allocation3], 256
        $region44: #{tpu_custom_call.1} parent=39 // pred_fallthru
          _
        %s243 = smul.u32 2, %s25
        %p244 = scmp.lt.s32.totalorder %s243, 3
        %s245 = scalar_select %p244, %s243, 3
        %s246 = smul.addr %s245, 8
        %s247 = scalar_lea.vmem %s0, %s246
        %p248 = pneg %p46
        %p249 = pneg %p43
        %p250 = pneg %p67
        %p251 = pneg %p64
        %p252 = pneg %p88
        %p253 = pneg %p85
        %p254 = pneg %p109
        %p255 = pneg %p106
        %p256 = pneg %p130
        %p257 = pneg %p127
        %p258 = pneg %p156
        %p259 = pneg %p153
        %s260 = sand.u32 %s143, 1
        %s261 = scalar_lea.sflag [#allocation4], %s260
        %s262 = sand.u32 %s143, 1
        %s263 = smul.addr %s262, 16
        %s264 = scalar_lea.vmem [#allocation5], %s263
        %p265 = pneg %p182
        %p266 = pneg %p179
        %s267 = sand.u32 %s169, 1
        %s268 = scalar_lea.sflag [#allocation7], %s267
        %s269 = sand.u32 %s169, 1
        %s270 = smul.addr %s269, 16
        %s271 = scalar_lea.vmem [#allocation6], %s270
        %s272 = smul.u32 2, %s25
        %p273 = scmp.lt.s32.totalorder %s272, 3
        %s274 = scalar_select %p273, %s272, 3
        %s275 = smul.addr %s274, 8
        %s276 = scalar_lea.vmem %s0, %s275
        %s277 = smul.u32 2, %s25
        %s278 = smul.u32 2, %s25
        %s279 = smul.u32 2, %s25
        %v280 = vld [vmem:[%s276] sm:$0xff]
        %v281 = vld [vmem:[%s276 + $0x8] sm:$0xff]
        %v282 = vld [vmem:[%s1] sm:$0xff]
        %v283 = vld [vmem:[%s1 + $0x8] sm:$0xff]
        %v284 = vld [vmem:[%s3] sm:$0xff]
        %v285 = vld [vmem:[%s3 + $0x8] sm:$0xff]
        %vm286 = vcmask 130048
        %v288 = vsel %vm286, %v280, 0
        %v291 = vsel %vm286, %v281, 0
        %293 = vmatprep.subr.mxu0 0.0
        %294 = vmatpush1.msra.mxu0 %v282
        %295 = vmatprep.subr.mxu0 0.0
        %296 = vmatpush1.msra.mxu0 %v283
        %297 = vmatprep.subr.mxu0 0.0
        %298 = vmatpush1.msra.mxu0 0.0
        %299 = vmatprep.subr.mxu0 0.0
        %300 = vmatpush1.msra.mxu0 0.0
        %301 = vmatprep.subr.mxu0 0.0
        %302 = vmatpush1.msra.mxu0 0.0
        %303 = vmatprep.subr.mxu0 0.0
        %304 = vmatpush1.msra.mxu0 0.0
        %305 = vmatprep.subr.mxu0 0.0
        %306 = vmatpush1.msra.mxu0 0.0
        %307 = vmatprep.subr.mxu0 0.0
        %308 = vmatpush1.msra.mxu0 0.0
        %309 = vmatprep.subr.mxu0 0.0
        %310 = vmatpush1.msra.mxu0 0.0
        %311 = vmatprep.subr.mxu0 0.0
        %312 = vmatpush1.msra.mxu0 0.0
        %313 = vmatprep.subr.mxu0 0.0
        %314 = vmatpush1.msra.mxu0 0.0
        %315 = vmatprep.subr.mxu0 0.0
        %316 = vmatpush1.msra.mxu0 0.0
        %317 = vmatprep.subr.mxu0 0.0
        %318 = vmatpush1.msra.mxu0 0.0
        %319 = vmatprep.subr.mxu0 0.0
        %320 = vmatpush1.msra.mxu0 0.0
        %321 = vmatprep.subr.mxu0 0.0
        %322 = vmatpush1.msra.mxu0 0.0
        %323 = vmatprep.subr.mxu0 0.0
        %324 = vmatpush1.msra.mxu0 0.0
        %325 = vmatprep.subr.mxu0 0.0
        %326 = vmatpush1.msra.mxu0 0.0
        %327 = vmatprep.subr.mxu0 0.0
        %328 = vmatpush1.msra.mxu0 0.0
        %329 = vmatprep.subr.mxu0 0.0
        %330 = vmatpush1.msra.mxu0 0.0
        %331 = vmatprep.subr.mxu0 0.0
        %332 = vmatpush1.msra.mxu0 0.0
        %333 = vmatprep.subr.mxu0 0.0
        %334 = vmatpush1.msra.mxu0 0.0
        %335 = vmatprep.subr.mxu0 0.0
        %336 = vmatpush1.msra.mxu0 0.0
        %337 = vmatprep.subr.mxu0 0.0
        %338 = vmatpush1.msra.mxu0 0.0
        %339 = vmatprep.subr.mxu0 0.0
        %340 = vmatpush1.msra.mxu0 0.0
        %341 = vmatprep.subr.mxu0 0.0
        %342 = vmatpush1.msra.mxu0 0.0
        %343 = vmatprep.subr.mxu0 0.0
        %344 = vmatpush1.msra.mxu0 0.0
        %345 = vmatprep.subr.mxu0 0.0
        %346 = vmatpush1.msra.mxu0 0.0
        %347 = vmatprep.subr.mxu0 0.0
        %348 = vmatpush1.msra.mxu0 0.0
        %349 = vmatprep.subr.mxu0 0.0
        %350 = vmatpush1.msra.mxu0 0.0
        %351 = vmatprep.subr.mxu0 0.0
        %352 = vmatpush1.msra.mxu0 0.0
        %353 = vmatprep.subr.mxu0 0.0
        %354 = vmatpush1.msra.mxu0 0.0
        %355 = vmatprep.subr.mxu0 0.0
        %356 = vmatpush1.msra.mxu0 0.0
        %357 = vmatprep.mubr.f32.mxu0 0.0
        %358 = vmatmul.mubr.f32.gmra.mrb[0].mxu0 %v288
        %v359 = vpop.f32.mrb[0].mxu0
        %v360 = vadd.f32 %v284, %v359
        %v361 = vpop.f32.mrb[0].mxu0
        %362 = vmatprep.mubr.f32.mxu0 0.0
        %363 = vmatmul.mubr.f32.gmra.mrb[0].mxu0 %v291
        %v364 = vpop.f32.mrb[0].mxu0
        %v365 = vadd.f32 %v285, %v364
        %v366 = vpop.f32.mrb[0].mxu0
        %367 = vdwg.mxu0
        %vm368 = vcmask 261120
        %369 = vst.msk [vmem:[%s264] sm:$0xff] %vm368, %v360
        %370 = vst.msk [vmem:[%s264 + $0x8] sm:$0xff] %vm368, %v365
        %v371 = vld [vmem:[%s2] sm:$0xff]
        %v372 = vld [vmem:[%s2 + $0x8] sm:$0xff]
        %v373 = vld [vmem:[#allocation2] sm:$0xff]
        %v374 = vld [vmem:[#allocation2 + $0x8] sm:$0xff]
        %375 = vmatprep.subr.mxu0 0.0
        %376 = vmatpush1.msra.mxu0 %v371
        %377 = vmatprep.subr.mxu0 0.0
        %378 = vmatpush1.msra.mxu0 %v372
        %379 = vmatprep.subr.mxu0 0.0
        %380 = vmatpush1.msra.mxu0 0.0
        %381 = vmatprep.subr.mxu0 0.0
        %382 = vmatpush1.msra.mxu0 0.0
        %383 = vmatprep.subr.mxu0 0.0
        %384 = vmatpush1.msra.mxu0 0.0
        %385 = vmatprep.subr.mxu0 0.0
        %386 = vmatpush1.msra.mxu0 0.0
        %387 = vmatprep.subr.mxu0 0.0
        %388 = vmatpush1.msra.mxu0 0.0
        %389 = vmatprep.subr.mxu0 0.0
        %390 = vmatpush1.msra.mxu0 0.0
        %391 = vmatprep.subr.mxu0 0.0
        %392 = vmatpush1.msra.mxu0 0.0
        %393 = vmatprep.subr.mxu0 0.0
        %394 = vmatpush1.msra.mxu0 0.0
        %395 = vmatprep.subr.mxu0 0.0
        %396 = vmatpush1.msra.mxu0 0.0
        %397 = vmatprep.subr.mxu0 0.0
        %398 = vmatpush1.msra.mxu0 0.0
        %399 = vmatprep.subr.mxu0 0.0
        %400 = vmatpush1.msra.mxu0 0.0
        %401 = vmatprep.subr.mxu0 0.0
        %402 = vmatpush1.msra.mxu0 0.0
        %403 = vmatprep.subr.mxu0 0.0
        %404 = vmatpush1.msra.mxu0 0.0
        %405 = vmatprep.subr.mxu0 0.0
        %406 = vmatpush1.msra.mxu0 0.0
        %407 = vmatprep.subr.mxu0 0.0
        %408 = vmatpush1.msra.mxu0 0.0
        %409 = vmatprep.subr.mxu0 0.0
        %410 = vmatpush1.msra.mxu0 0.0
        %411 = vmatprep.subr.mxu0 0.0
        %412 = vmatpush1.msra.mxu0 0.0
        %413 = vmatprep.subr.mxu0 0.0
        %414 = vmatpush1.msra.mxu0 0.0
        %415 = vmatprep.subr.mxu0 0.0
        %416 = vmatpush1.msra.mxu0 0.0
        %417 = vmatprep.subr.mxu0 0.0
        %418 = vmatpush1.msra.mxu0 0.0
        %419 = vmatprep.subr.mxu0 0.0
        %420 = vmatpush1.msra.mxu0 0.0
        %421 = vmatprep.subr.mxu0 0.0
        %422 = vmatpush1.msra.mxu0 0.0
        %423 = vmatprep.subr.mxu0 0.0
        %424 = vmatpush1.msra.mxu0 0.0
        %425 = vmatprep.subr.mxu0 0.0
        %426 = vmatpush1.msra.mxu0 0.0
        %427 = vmatprep.subr.mxu0 0.0
        %428 = vmatpush1.msra.mxu0 0.0
        %429 = vmatprep.subr.mxu0 0.0
        %430 = vmatpush1.msra.mxu0 0.0
        %431 = vmatprep.subr.mxu0 0.0
        %432 = vmatpush1.msra.mxu0 0.0
        %433 = vmatprep.subr.mxu0 0.0
        %434 = vmatpush1.msra.mxu0 0.0
        %435 = vmatprep.subr.mxu0 0.0
        %436 = vmatpush1.msra.mxu0 0.0
        %437 = vmatprep.subr.mxu0 0.0
        %438 = vmatpush1.msra.mxu0 0.0
        %439 = vmatprep.mubr.f32.mxu0 0.0
        %440 = vmatmul.mubr.f32.gmra.mrb[0].mxu0 %v288
        %v441 = vpop.f32.mrb[0].mxu0
        %v442 = vadd.f32 %v373, %v441
        %v443 = vpop.f32.mrb[0].mxu0
        %444 = vmatprep.mubr.f32.mxu0 0.0
        %445 = vmatmul.mubr.f32.gmra.mrb[0].mxu0 %v291
        %v446 = vpop.f32.mrb[0].mxu0
        %v447 = vadd.f32 %v374, %v446
        %v448 = vpop.f32.mrb[0].mxu0
        %449 = vdwg.mxu0
        %450 = vst.msk [vmem:[%s271] sm:$0xff] %vm368, %v442
        %451 = vst.msk [vmem:[%s271 + $0x8] sm:$0xff] %vm368, %v447
        %s452 = sand.u32 %s143, 1
        %s453 = scalar_lea.sflag [#allocation4], %s452
        %s454 = sand.u32 %s143, 1
        %s455 = smul.addr %s454, 16
        %s456 = scalar_lea.vmem [#allocation5], %s455
        %s457 = sand.u32 %s169, 1
        %s458 = scalar_lea.sflag [#allocation7], %s457
        %s459 = sand.u32 %s169, 1
        %s460 = smul.addr %s459, 16
        %s461 = scalar_lea.vmem [#allocation6], %s460
        // Predicated region
        $region45: #{tpu_custom_call.1} parent=39 // pred_check
          %p462 = pneg %p153
        $region46: #{tpu_custom_call.1} parent=39 // pred_check_branch
          %464 = sbr.rel (%p462) target = $region48
        $region47: #{tpu_custom_call.1} parent=39 // pred_region
          %s465 = smul.u32 2, %s25
          %s467 = ssub.s32 256, 256
          %468 = vsyncadd %s453, %s467
          %s469 = smul.addr %s465, 128
          %s470 = scalar_lea.hbm %s5, %s469
          %s471 = sshll.u32 %s456, 4
          %s472 = int_to_ptr.vmem [resolvable:$true] %s471
          %477 = dma.vmem_to_hbm [thread:$0]  %s472, 256, %s470, %s453, 128, 128, 8
        $region48: #{tpu_custom_call.1} parent=39 // pred_fallthru
          _
        // Predicated region
        $region49: #{tpu_custom_call.1} parent=39 // pred_check
          %p478 = pneg %p179
        $region50: #{tpu_custom_call.1} parent=39 // pred_check_branch
          %480 = sbr.rel (%p478) target = $region52
        $region51: #{tpu_custom_call.1} parent=39 // pred_region
          %s481 = smul.u32 2, %s25
          %s483 = ssub.s32 256, 256
          %484 = vsyncadd %s458, %s483
          %s485 = smul.addr %s481, 128
          %s486 = scalar_lea.hbm %s6, %s485
          %s487 = sshll.u32 %s461, 4
          %s488 = int_to_ptr.vmem [resolvable:$true] %s487
          %493 = dma.vmem_to_hbm [thread:$0]  %s488, 256, %s486, %s458, 128, 128, 8
        $region52: #{tpu_custom_call.1} parent=39 // pred_fallthru
          _
      $region40: #{tpu_custom_call.1} parent=5 // pred_fallthru
        _
      %p494 = scmp.le.s32.totalorder 2, %s20
      // Predicated region
      $region53: #{tpu_custom_call.1} parent=5 // pred_check
        %p495 = pneg %p494
      $region54: #{tpu_custom_call.1} parent=5 // pred_check_branch
        %497 = sbr.rel (%p495) target = $region56
      $region55: #{tpu_custom_call.1} parent=5 // pred_region
        %s498 = ssub.s32 %s20, 2
        // Predicated region
        $region57: #{tpu_custom_call.1} parent=55 // pred_check
          %p499 = pneg %p159
        $region58: #{tpu_custom_call.1} parent=55 // pred_check_branch
          %501 = sbr.rel (%p499) target = $region60
        $region59: #{tpu_custom_call.1} parent=55 // pred_region
          %s502 = sand.u32 %s144, 1
          %s503 = scalar_lea.sflag [#allocation4], %s502
          %s504 = sand.u32 %s144, 1
          %s505 = smul.addr %s504, 16
          %s506 = scalar_lea.vmem [#allocation5], %s505
          %507 = dma.done %s503, 256
        $region60: #{tpu_custom_call.1} parent=55 // pred_fallthru
          _
        // Predicated region
        $region61: #{tpu_custom_call.1} parent=55 // pred_check
          %p508 = pneg %p185
        $region62: #{tpu_custom_call.1} parent=55 // pred_check_branch
          %510 = sbr.rel (%p508) target = $region64
        $region63: #{tpu_custom_call.1} parent=55 // pred_region
          %s511 = sand.u32 %s170, 1
          %s512 = scalar_lea.sflag [#allocation7], %s511
          %s513 = sand.u32 %s170, 1
          %s514 = smul.addr %s513, 16
          %s515 = scalar_lea.vmem [#allocation6], %s514
          %516 = dma.done %s512, 256
        $region64: #{tpu_custom_call.1} parent=55 // pred_fallthru
          _
      $region56: #{tpu_custom_call.1} parent=5 // pred_fallthru
        _
    $region6: #{tpu_custom_call.1} parent=1 // loop_footer
      %s24 = sadd.s32 1, %s20
    $region7: #{tpu_custom_call.1} parent=1 // loop_footer_branch
      %19 = sbr.rel target = $region3
    $region8: #{tpu_custom_call.1} parent=1 // loop_exit
      _
    %517 = vsyncpa [#allocation3], 1
    %s518 = scalar_lea.sflag [#allocation3], 1
    %519 = vsyncpa %s518, 1
    %520 = vsyncpa [#allocation4], 1
    %s521 = scalar_lea.sflag [#allocation4], 1
    %522 = vsyncpa %s521, 1
    %523 = vsyncpa [#allocation7], 1
    %s524 = scalar_lea.sflag [#allocation7], 1
    %525 = vsyncpa %s524, 1

</llo_original>
